<compile_context>
chip_gen: v5e
topology: v5e:2x2
jax: 0.10.0
libtpu: 0.0.40
codegen_flags: <defaults>
</compile_context>

<pallas_src>
import functools

import jax
import jax.numpy as jnp
from jax.experimental import pallas as pl
from jax.experimental.pallas import tpu as pltpu


def _cdiv(a, b):
    return -(-a // b)


def _round_up(a, b):
    return _cdiv(a, b) * b


def _wmse_kernel(*refs, tile_m, spp, total_rows, weight_mode, need_mask):
    """Accumulate sum((y - y_t)^2 [* w]) for this core's row range.

    Grid is (P, spp): axis 0 is megacore-parallel, axis 1 is the reduction.
    acc_ref is a lane-wide (1, N) running sum; the scalar cross-lane reduce
    happens once, in the last reduction step.
    """
    if weight_mode == "none":
        y_ref, yt_ref, o_ref, acc_ref = refs
        w_ref = None
    else:
        y_ref, yt_ref, w_ref, o_ref, acc_ref = refs

    p = pl.program_id(0)
    i = pl.program_id(1)

    @pl.when(i == 0)
    def _():
        acc_ref[...] = jnp.zeros_like(acc_ref)

    y = y_ref[...].astype(jnp.float32)
    yt = yt_ref[...].astype(jnp.float32)
    d = y - yt
    sq = d * d
    if weight_mode != "none":
        # "column": (tile_m, 1) per-row weights broadcast over lanes in VMEM.
        # "full":   (tile_m, N) elementwise weights.
        sq = sq * w_ref[...].astype(jnp.float32)

    if need_mask:
        # Ragged last tile / over-provisioned parallel split: zero out rows
        # past the true row count (their block contents are unspecified).
        row0 = (p * spp + i) * tile_m
        rows = row0 + jax.lax.broadcasted_iota(jnp.int32, (tile_m, 1), 0)
        sq = jnp.where(rows < total_rows, sq, 0.0)

    # Lane-wide accumulation: sublane reduce only, keeps the expensive
    # cross-lane reduce out of the per-step loop (and improves numerics).
    acc_ref[...] += jnp.sum(sq, axis=0, keepdims=True)

    @pl.when(i == spp - 1)
    def _():
        lane = jax.lax.broadcasted_iota(jnp.int32, (1, 128), 1)
        o_ref[...] = jnp.where(lane == 0, jnp.sum(acc_ref[...]), 0.0)


def weighted_mse_loss(y, y_t, weights=None, *, num_parallel=2,
                      stream_vmem_budget=12 * 1024 * 1024):
    """Pallas implementation of WeightedMSELoss.forward. Returns a scalar f32."""
    y = jnp.asarray(y)
    y_t = jnp.asarray(y_t)
    assert y.shape == y_t.shape
    total_elems = y.size
    orig_shape = y.shape

    # Scalar weight: mean(w * sq) == w * mean(sq); never stream it.
    scalar_w = None
    if weights is not None:
        weights = jnp.asarray(weights)
        if weights.size == 1:
            scalar_w = weights.astype(jnp.float32).reshape(())
            weights = None

    # ---- choose a 2-D [rows, lanes] layout (no host-side padding) ----------
    if y.ndim >= 2:
        N = orig_shape[-1]
        M = total_elems // N
    else:
        if total_elems >= 128 and total_elems % 128 == 0:
            M, N = total_elems // 128, 128
        else:
            M, N = 1, total_elems
    y2 = y.reshape(M, N)
    yt2 = y_t.reshape(M, N)

    # ---- weights: keep narrow when they do not vary along the lane axis ----
    weight_mode = "none"
    w_arr = None
    if weights is not None:
        lane_inv = (weights.ndim == 0 or weights.shape[-1] == 1
                    or orig_shape[-1] == 1)
        if y.ndim >= 2 and lane_inv:
            weight_mode = "column"
            w_arr = jnp.broadcast_to(
                weights, orig_shape[:-1] + (1,)).reshape(M, 1)
        else:
            weight_mode = "full"
            w_arr = jnp.broadcast_to(weights, orig_shape).reshape(M, N)

    # ---- tile / grid selection ---------------------------------------------
    stream_itemsize = y2.dtype.itemsize + yt2.dtype.itemsize
    if weight_mode == "full":
        stream_itemsize += w_arr.dtype.itemsize
    bytes_per_row = max(1, N * stream_itemsize)

    if M >= 8:
        # Biggest row tile keeping double-buffered streams under the budget.
        tile_m = max(8, (stream_vmem_budget // (2 * bytes_per_row)) // 8 * 8)
        # No point exceeding one core's share of the rows.
        per_core_rows = _cdiv(M, num_parallel)
        tile_m = min(tile_m, _round_up(per_core_rows, 8))
        # For 16-bit inputs keep rows a multiple of 16 (sublane packing).
        if y2.dtype.itemsize == 2 and tile_m >= 16 and tile_m % 16 != 0:
            tile_m = tile_m // 16 * 16
    else:
        tile_m = M
    # TODO(synk): for extremely wide rows (N*itemsize >> VMEM budget) the lane
    # axis would also need tiling; not needed for loss-sized inputs.

    steps = _cdiv(M, tile_m)                       # total row blocks
    P = max(1, min(num_parallel, steps))           # megacore split
    spp = _cdiv(steps, P)                          # reduction steps per core
    need_mask = (M % tile_m != 0) or (P * spp != steps)

    if P * spp == steps:
        def row_map(p, i):
            return (p * spp + i, 0)
    else:
        last_blk = steps - 1

        def row_map(p, i):
            return (jnp.minimum(p * spp + i, last_blk), 0)

    row_spec = pl.BlockSpec((tile_m, N), row_map)
    in_specs = [row_spec, row_spec]
    operands = [y2, yt2]
    if weight_mode == "column":
        in_specs.append(pl.BlockSpec((tile_m, 1), row_map))
        operands.append(w_arr)
    elif weight_mode == "full":
        in_specs.append(row_spec)
        operands.append(w_arr)

    kernel = functools.partial(
        _wmse_kernel, tile_m=tile_m, spp=spp, total_rows=M,
        weight_mode=weight_mode, need_mask=need_mask)

    bytes_accessed = sum(int(op.size) * op.dtype.itemsize for op in operands)
    cost = pl.CostEstimate(flops=3 * total_elems, transcendentals=0,
                           bytes_accessed=bytes_accessed)

    out = pl.pallas_call(
        kernel,
        out_shape=jax.ShapeDtypeStruct((1, P * 128), jnp.float32),
        grid_spec=pltpu.PrefetchScalarGridSpec(
            num_scalar_prefetch=0,
            grid=(P, spp),
            in_specs=in_specs,
            out_specs=pl.BlockSpec((1, 128), lambda p, i: (0, p)),
            scratch_shapes=[pltpu.VMEM((1, N), jnp.float32)],
        ),
        compiler_params=pltpu.CompilerParams(
            dimension_semantics=("parallel", "arbitrary"),
            vmem_limit_bytes=32 * 1024 * 1024,
        ),
        cost_estimate=cost,
    )(*operands)

    loss = jnp.sum(out) / jnp.float32(total_elems)
    if scalar_w is not None:
        loss = loss * scalar_w
    return loss


if __name__ == "__main__":
    key = jax.random.PRNGKey(0)
    k1, k2, k3 = jax.random.split(key, 3)

    # Small shapes consistent with a per-sample regression loss: [batch, feat]
    y = jax.random.normal(k1, (16, 256), dtype=jnp.float32)
    y_t = jax.random.normal(k2, (16, 256), dtype=jnp.float32)
    # per-sample weights, broadcast across the feature axis (expand_as)
    weights = jax.random.uniform(k3, (16, 1), dtype=jnp.float32)

    # weighted path (narrow per-row weights -> "column" mode)
    loss_w = weighted_mse_loss(y, y_t, weights)
    jax.block_until_ready(loss_w)
    ref_w = jnp.mean((y - y_t) ** 2 * jnp.broadcast_to(weights, y.shape))
    assert jnp.allclose(loss_w, ref_w, rtol=1e-5, atol=1e-6), (loss_w, ref_w)

    # unweighted path (only 2 operands streamed)
    loss_u = weighted_mse_loss(y, y_t, None)
    jax.block_until_ready(loss_u)
    ref_u = jnp.mean((y - y_t) ** 2)
    assert jnp.allclose(loss_u, ref_u, rtol=1e-5, atol=1e-6), (loss_u, ref_u)

    # full elementwise weights ("full" mode)
    w_full = jax.random.uniform(k3, (16, 256), dtype=jnp.float32)
    loss_f = weighted_mse_loss(y, y_t, w_full)
    jax.block_until_ready(loss_f)
    ref_f = jnp.mean((y - y_t) ** 2 * w_full)
    assert jnp.allclose(loss_f, ref_f, rtol=1e-5, atol=1e-6), (loss_f, ref_f)

    # ragged shape: exercises the in-kernel row mask (no host-side padding)
    ky1, ky2, kw = jax.random.split(jax.random.PRNGKey(1), 3)
    yr = jax.random.normal(ky1, (13, 40), dtype=jnp.float32)
    yr_t = jax.random.normal(ky2, (13, 40), dtype=jnp.float32)
    wr = jax.random.uniform(kw, (13, 1), dtype=jnp.float32)
    loss_r = weighted_mse_loss(yr, yr_t, wr)
    jax.block_until_ready(loss_r)
    ref_r = jnp.mean((yr - yr_t) ** 2 * jnp.broadcast_to(wr, yr.shape))
    assert jnp.allclose(loss_r, ref_r, rtol=1e-5, atol=1e-6), (loss_r, ref_r)

    print("KERNEL_OK")
</pallas_src>

<mosaic_0001>
module attributes {stable_mosaic.version = 11 : i64} {
  func.func @_wmse_kernel(%arg0: i32, %arg1: i32, %arg2: memref<8x256xf32, #tpu.memory_space<vmem>>, %arg3: memref<8x256xf32, #tpu.memory_space<vmem>>, %arg4: memref<8x1xf32, #tpu.memory_space<vmem>>, %arg5: memref<1x128xf32, #tpu.memory_space<vmem>>, %arg6: memref<1x256xf32, #tpu.memory_space<vmem>>) attributes {dimension_semantics = [#tpu.dimension_semantics<parallel>, #tpu.dimension_semantics<arbitrary>], iteration_bounds = array<i64: 2, 1>, scalar_prefetch = 0 : i64, scratch_operands = 1 : i64, tpu.core_type = #tpu.core_type<tc>, window_params = [{transform_indices = @transform_0, window_bounds = array<i64: 8, 256>}, {transform_indices = @transform_1, window_bounds = array<i64: 8, 256>}, {transform_indices = @transform_2, window_bounds = array<i64: 8, 1>}, {transform_indices = @transform_3, window_bounds = array<i64: 1, 128>}]} {
    %c0_i32 = arith.constant 0 : i32
    %0 = arith.cmpi eq, %arg1, %c0_i32 : i32
    %1 = arith.extui %0 : i1 to i32
    %c0_i32_0 = arith.constant 0 : i32
    %2 = arith.cmpi ne, %1, %c0_i32_0 : i32
    scf.if %2 {
      %cst_12 = arith.constant 0.000000e+00 : f32
      %18 = vector.broadcast %cst_12 : f32 to vector<1x256xf32>
      %c0_13 = arith.constant 0 : index
      %c0_14 = arith.constant 0 : index
      %19 = vector.load %arg6[%c0_13, %c0_14] : memref<1x256xf32, #tpu.memory_space<vmem>>, vector<1x256xf32>
      tpu.vector_store %arg6[%c0_13, %c0_14], %18 {strides = array<i32>} : memref<1x256xf32, #tpu.memory_space<vmem>>, vector<1x256xf32>,
    } else {
    }
    %c0 = arith.constant 0 : index
    %c0_1 = arith.constant 0 : index
    %3 = vector.load %arg2[%c0, %c0_1] : memref<8x256xf32, #tpu.memory_space<vmem>>, vector<8x256xf32>
    %c0_2 = arith.constant 0 : index
    %c0_3 = arith.constant 0 : index
    %4 = vector.load %arg3[%c0_2, %c0_3] : memref<8x256xf32, #tpu.memory_space<vmem>>, vector<8x256xf32>
    %5 = arith.subf %3, %4 : vector<8x256xf32>
    %6 = arith.mulf %5, %5 : vector<8x256xf32>
    %c0_4 = arith.constant 0 : index
    %c0_5 = arith.constant 0 : index
    %7 = vector.load %arg4[%c0_4, %c0_5] : memref<8x1xf32, #tpu.memory_space<vmem>>, vector<8x1xf32>
    %8 = vector.broadcast %7 : vector<8x1xf32> to vector<8x256xf32>
    %9 = arith.mulf %6, %8 : vector<8x256xf32>
    %c0_6 = arith.constant 0 : index
    %c0_7 = arith.constant 0 : index
    %10 = vector.load %arg6[%c0_6, %c0_7] : memref<1x256xf32, #tpu.memory_space<vmem>>, vector<1x256xf32>
    %cst = arith.constant dense<0.000000e+00> : vector<256xf32>
    %11 = vector.multi_reduction <add>, %9, %cst [0] : vector<8x256xf32> to vector<256xf32>
    %12 = vector.shape_cast %11 : vector<256xf32> to vector<1x256xf32>
    %13 = arith.addf %10, %12 : vector<1x256xf32>
    %c0_8 = arith.constant 0 : index
    %c0_9 = arith.constant 0 : index
    %14 = vector.load %arg6[%c0_8, %c0_9] : memref<1x256xf32, #tpu.memory_space<vmem>>, vector<1x256xf32>
    tpu.vector_store %arg6[%c0_8, %c0_9], %13 {strides = array<i32>} : memref<1x256xf32, #tpu.memory_space<vmem>>, vector<1x256xf32>,
    %c0_i32_10 = arith.constant 0 : i32
    %15 = arith.cmpi eq, %arg1, %c0_i32_10 : i32
    %16 = arith.extui %15 : i1 to i32
    %c0_i32_11 = arith.constant 0 : i32
    %17 = arith.cmpi ne, %16, %c0_i32_11 : i32
    scf.if %17 {
      %18 = tpu.iota {dimensions = array<i32: 1>} : vector<1x128xi32>
      %c0_i32_12 = arith.constant 0 : i32
      %19 = vector.broadcast %c0_i32_12 : i32 to vector<1x128xi32>
      %20 = arith.cmpi eq, %18, %19 : vector<1x128xi32>
      %c0_13 = arith.constant 0 : index
      %c0_14 = arith.constant 0 : index
      %21 = vector.load %arg6[%c0_13, %c0_14] : memref<1x256xf32, #tpu.memory_space<vmem>>, vector<1x256xf32>
      %22 = vector.shape_cast %21 : vector<1x256xf32> to vector<1x1x256xf32>
      %cst_15 = arith.constant dense<0.000000e+00> : vector<1xf32>
      %23 = vector.multi_reduction <add>, %22, %cst_15 [1, 2] : vector<1x1x256xf32> to vector<1xf32>
      %24 = vector.shape_cast %23 : vector<1xf32> to vector<1x1x1xf32>
      %25 = vector.extract %24[0, 0, 0] : f32 from vector<1x1x1xf32>
      %cst_16 = arith.constant 0.000000e+00 : f32
      %26 = vector.broadcast %25 : f32 to vector<1x128xf32>
      %27 = vector.broadcast %cst_16 : f32 to vector<1x128xf32>
      %28 = arith.select %20, %26, %27 : vector<1x128xi1>, vector<1x128xf32>
      %c0_17 = arith.constant 0 : index
      %c0_18 = arith.constant 0 : index
      %29 = vector.load %arg5[%c0_17, %c0_18] : memref<1x128xf32, #tpu.memory_space<vmem>>, vector<1x128xf32>
      tpu.vector_store %arg5[%c0_17, %c0_18], %28 {strides = array<i32>} : memref<1x128xf32, #tpu.memory_space<vmem>>, vector<1x128xf32>,
    } else {
    }
    return
  }
  func.func @transform_0(%arg0: i32, %arg1: i32) -> (i32, i32) {
    %c1_i32 = arith.constant 1 : i32
    %0 = arith.muli %arg0, %c1_i32 : i32
    %1 = arith.addi %0, %arg1 : i32
    %c0_i32 = arith.constant 0 : i32
    %c0_i32_0 = arith.constant 0 : i32
    return %1, %c0_i32 : i32, i32
  }
  func.func @transform_1(%arg0: i32, %arg1: i32) -> (i32, i32) {
    %c1_i32 = arith.constant 1 : i32
    %0 = arith.muli %arg0, %c1_i32 : i32
    %1 = arith.addi %0, %arg1 : i32
    %c0_i32 = arith.constant 0 : i32
    %c0_i32_0 = arith.constant 0 : i32
    return %1, %c0_i32 : i32, i32
  }
  func.func @transform_2(%arg0: i32, %arg1: i32) -> (i32, i32) {
    %c1_i32 = arith.constant 1 : i32
    %0 = arith.muli %arg0, %c1_i32 : i32
    %1 = arith.addi %0, %arg1 : i32
    %c0_i32 = arith.constant 0 : i32
    %c0_i32_0 = arith.constant 0 : i32
    return %1, %c0_i32 : i32, i32
  }
  func.func @transform_3(%arg0: i32, %arg1: i32) -> (i32, i32) {
    %c0_i32 = arith.constant 0 : i32
    %c0_i32_0 = arith.constant 0 : i32
    return %c0_i32, %arg0 : i32, i32
  }
}

</mosaic_0001>

<llo_original>
// kernel: tpu_custom_call.1
$region0: #{tpu_custom_call.1}
  #allocation0 [shape = 'u32[]', space=smem, size = 0x4, offset = 0x4, fixed_abs, tag = 'smem constant byte address 0x4 - core index']
  #allocation1 [shape = 'u32[72,128]{1,0:T(1,128)}', space=vmem, size = 0x9000, scoped, tag = 'internal scratch']
  #allocation2 [shape = 'f32[1,256]{1,0:T(1,128)}', space=vmem, size = 0x400, scoped, tag = 'scratch operand']
  %s0 = inlined_call_operand.hbm [shape: f32[16,256], index: 0, kind: input, shape index: {}]
  %s1 = inlined_call_operand.hbm [shape: f32[16,256], index: 1, kind: input, shape index: {}]
  %s2 = inlined_call_operand.vmem [shape: f32[16,1], index: 2, kind: input, shape index: {}]
  %s3 = inlined_call_operand.hbm [shape: f32[1,256], index: 3, kind: output, shape index: {}]
  %s4 = sld [smem:[#allocation0]]
  $region61: #{tpu_custom_call.1} parent=0
    _
  %s6 = ssub.s32 1, %s4
  %s7 = scalar_select 0, %s6, %s4
  $region1: #{tpu_custom_call.1} parent=0
    #allocation3 [shape = 'u8[16384]{0}', space=vmem, size = 0x4000, scoped, tag = 'input window, operand 0']
    #allocation4 [shape = 's32[2]{0}', space=sflag, size = 0x8, scoped, tag = 'scoped memory for tpu_custom_call.1']
    #allocation5 [shape = 's32[2]{0}', space=sflag, size = 0x8, scoped, tag = 'scoped memory for tpu_custom_call.1']
    #allocation6 [shape = 'u8[16384]{0}', space=vmem, size = 0x4000, scoped, tag = 'input window, operand 1']
    #allocation7 [shape = 's32[2]{0}', space=sflag, size = 0x8, scoped, tag = 'scoped memory for tpu_custom_call.1']
    #allocation8 [shape = 'u8[1024]{0}', space=vmem, size = 0x400, scoped, tag = 'output window, operand 0']
    %8 = vsyncpa [#allocation4], 0
    %s9 = scalar_lea.sflag [#allocation4], 1
    %10 = vsyncpa %s9, 0
    %11 = vsyncpa [#allocation7], 0
    %s12 = scalar_lea.sflag [#allocation7], 1
    %13 = vsyncpa %s12, 0
    %14 = vsyncpa [#allocation5], 0
    %s15 = scalar_lea.sflag [#allocation5], 1
    %16 = vsyncpa %s15, 0
    loop: start=0, step=1, limit=4
    $region2: #{tpu_custom_call.1} parent=1 // loop_pre_header
      _
    $region3: #{tpu_custom_call.1} parent=1 // loop_header
      %s18 = sphi 0, %s22
      %p19 = scmp.ge.s32.totalorder %s18, 4
      %s25 = sphi 0, %s37
      %s26 = sphi 0, %s33
      %s27 = sphi 0, %s25
      %s28 = sphi 0, %s26
      %s29 = sphi 0, %s27
      %s30 = sphi 0, %s28
      %s42 = sphi 0, %s44
      %s45 = sphi 0, %s42
      %s46 = sphi 0, %s45
      %s62 = sphi 0, %s46
      %s70 = sphi 0, %s72
      %s73 = sphi 0, %s70
      %s74 = sphi 0, %s73
      %s90 = sphi 0, %s74
      %s98 = sphi 0, %s100
      %s101 = sphi 0, %s98
      %s102 = sphi 0, %s101
      %s118 = sphi 0, %s102
      %s124 = sphi 0, %s126
      %s127 = sphi 0, %s124
      %s128 = sphi 0, %s127
      %s144 = sphi 0, %s128
    $region4: #{tpu_custom_call.1} parent=1 // loop_header_branch
      %21 = sbr.rel (%p19) target = $region8
    $region5: #{tpu_custom_call.1} parent=1 // loop_body
      %s23 = ssub.s32 %s18, 1
      %s24 = ssub.s32 %s18, 2
      %s31 = sadd.s32 1, %s26
      %p32 = scmp.ge.s32.totalorder %s31, 1
      %s33 = scalar_select %p32, 0, %s31
      %s34 = sadd.s32 1, %s25
      %s35 = scalar_select %p32, %s34, %s25
      %p36 = scmp.ge.s32.totalorder %s35, 2
      %s37 = scalar_select %p36, 0, %s35
      %s38 = sadd.s32 %s25, %s26
      %s39 = sadd.s32 %s37, %s33
      %s40 = ssub.s32 %s38, %s39
      %p41 = scmp.eq.s32.totalorder %s40, 0
      %s43 = sadd.s32 %s42, 1
      %s44 = scalar_select %p41, %s42, %s43
      %p47 = pneg %p41
      %p48 = scmp.eq.s32.totalorder %s18, 1
      %p49 = por %p47, %p48
      %p50 = scmp.ne.s32.totalorder %s42, %s45
      %p51 = scmp.eq.s32.totalorder %s18, 0
      %p52 = por %p50, %p51
      %p53 = scmp.ne.s32.totalorder %s42, %s45
      %p54 = scmp.eq.s32.totalorder %s23, 1
      %p55 = por %p53, %p54
      %p56 = scmp.ne.s32.totalorder %s45, %s46
      %p57 = scmp.eq.s32.totalorder %s23, 0
      %p58 = por %p56, %p57
      %p59 = scmp.ne.s32.totalorder %s45, %s46
      %p60 = scmp.eq.s32.totalorder %s24, 1
      %p61 = por %p59, %p60
      %p63 = scmp.ne.s32.totalorder %s46, %s62
      %p64 = scmp.eq.s32.totalorder %s24, 0
      %p65 = por %p63, %p64
      %s66 = sadd.s32 %s25, %s26
      %s67 = sadd.s32 %s37, %s33
      %s68 = ssub.s32 %s66, %s67
      %p69 = scmp.eq.s32.totalorder %s68, 0
      %s71 = sadd.s32 %s70, 1
      %s72 = scalar_select %p69, %s70, %s71
      %p75 = pneg %p69
      %p76 = scmp.eq.s32.totalorder %s18, 1
      %p77 = por %p75, %p76
      %p78 = scmp.ne.s32.totalorder %s70, %s73
      %p79 = scmp.eq.s32.totalorder %s18, 0
      %p80 = por %p78, %p79
      %p81 = scmp.ne.s32.totalorder %s70, %s73
      %p82 = scmp.eq.s32.totalorder %s23, 1
      %p83 = por %p81, %p82
      %p84 = scmp.ne.s32.totalorder %s73, %s74
      %p85 = scmp.eq.s32.totalorder %s23, 0
      %p86 = por %p84, %p85
      %p87 = scmp.ne.s32.totalorder %s73, %s74
      %p88 = scmp.eq.s32.totalorder %s24, 1
      %p89 = por %p87, %p88
      %p91 = scmp.ne.s32.totalorder %s74, %s90
      %p92 = scmp.eq.s32.totalorder %s24, 0
      %p93 = por %p91, %p92
      %s94 = sadd.s32 %s25, %s26
      %s95 = sadd.s32 %s37, %s33
      %s96 = ssub.s32 %s94, %s95
      %p97 = scmp.eq.s32.totalorder %s96, 0
      %s99 = sadd.s32 %s98, 1
      %s100 = scalar_select %p97, %s98, %s99
      %p103 = pneg %p97
      %p104 = scmp.eq.s32.totalorder %s18, 1
      %p105 = por %p103, %p104
      %p106 = scmp.ne.s32.totalorder %s98, %s101
      %p107 = scmp.eq.s32.totalorder %s18, 0
      %p108 = por %p106, %p107
      %p109 = scmp.ne.s32.totalorder %s98, %s101
      %p110 = scmp.eq.s32.totalorder %s23, 1
      %p111 = por %p109, %p110
      %p112 = scmp.ne.s32.totalorder %s101, %s102
      %p113 = scmp.eq.s32.totalorder %s23, 0
      %p114 = por %p112, %p113
      %p115 = scmp.ne.s32.totalorder %s101, %s102
      %p116 = scmp.eq.s32.totalorder %s24, 1
      %p117 = por %p115, %p116
      %p119 = scmp.ne.s32.totalorder %s102, %s118
      %p120 = scmp.eq.s32.totalorder %s24, 0
      %p121 = por %p119, %p120
      %s122 = ssub.s32 %s25, %s37
      %p123 = scmp.eq.s32.totalorder %s122, 0
      %s125 = sadd.s32 %s124, 1
      %s126 = scalar_select %p123, %s124, %s125
      %p129 = pneg %p123
      %p130 = scmp.eq.s32.totalorder %s18, 1
      %p131 = por %p129, %p130
      %p132 = scmp.ne.s32.totalorder %s124, %s127
      %p133 = scmp.eq.s32.totalorder %s18, 0
      %p134 = por %p132, %p133
      %p135 = scmp.ne.s32.totalorder %s124, %s127
      %p136 = scmp.eq.s32.totalorder %s23, 1
      %p137 = por %p135, %p136
      %p138 = scmp.ne.s32.totalorder %s127, %s128
      %p139 = scmp.eq.s32.totalorder %s23, 0
      %p140 = por %p138, %p139
      %p141 = scmp.ne.s32.totalorder %s127, %s128
      %p142 = scmp.eq.s32.totalorder %s24, 1
      %p143 = por %p141, %p142
      %p145 = scmp.ne.s32.totalorder %s128, %s144
      %p146 = scmp.eq.s32.totalorder %s24, 0
      %p147 = por %p145, %p146
      %p148 = scmp.le.s32.totalorder 1, %s18
      %p149 = scmp.lt.s32.totalorder %s18, 3
      %p150 = pnand %p148, %p149
      %p151 = pneg %p150
      // Predicated region
      $region9: #{tpu_custom_call.1} parent=5 // pred_check
        _
      $region10: #{tpu_custom_call.1} parent=5 // pred_check_branch
        %153 = sbr.rel (%p150) target = $region12
      $region11: #{tpu_custom_call.1} parent=5 // pred_region
        %s154 = ssub.s32 %s18, 1
      $region12: #{tpu_custom_call.1} parent=5 // pred_fallthru
        _
      %p155 = scmp.lt.s32.totalorder %s18, 2
      // Predicated region
      $region13: #{tpu_custom_call.1} parent=5 // pred_check
        %p156 = pneg %p155
      $region14: #{tpu_custom_call.1} parent=5 // pred_check_branch
        %158 = sbr.rel (%p156) target = $region16
      $region15: #{tpu_custom_call.1} parent=5 // pred_region
        // Predicated region
        $region17: #{tpu_custom_call.1} parent=15 // pred_check
          %p159 = pneg %p52
        $region18: #{tpu_custom_call.1} parent=15 // pred_check_branch
          %161 = sbr.rel (%p159) target = $region20
        $region19: #{tpu_custom_call.1} parent=15 // pred_region
          %s162 = sand.u32 %s42, 1
          %s163 = scalar_lea.sflag [#allocation4], %s162
          %s164 = sand.u32 %s42, 1
          %s165 = smul.addr %s164, 16
          %s166 = scalar_lea.vmem [#allocation3], %s165
          %s167 = sadd.s32 %s25, %s26
          %169 = vsyncadd %s163, 0
          %s170 = smul.addr %s167, 2
          %s171 = smul.addr %s170, 8
          %s172 = scalar_lea.hbm %s0, %s171
          %s174 = sshll.u32 %s172, 4
          %s175 = int_to_ptr.hbm [resolvable:$true] %s174
          %s176 = sshll.u32 %s166, 4
          %s177 = int_to_ptr.vmem [resolvable:$true] %s176
          %179 = dma.hbm_to_vmem [thread:$0]  %s175, 256, %s177, %s163
        $region20: #{tpu_custom_call.1} parent=15 // pred_fallthru
          _
        // Predicated region
        $region21: #{tpu_custom_call.1} parent=15 // pred_check
          %p180 = pneg %p80
        $region22: #{tpu_custom_call.1} parent=15 // pred_check_branch
          %182 = sbr.rel (%p180) target = $region24
        $region23: #{tpu_custom_call.1} parent=15 // pred_region
          %s183 = sand.u32 %s70, 1
          %s184 = scalar_lea.sflag [#allocation7], %s183
          %s185 = sand.u32 %s70, 1
          %s186 = smul.addr %s185, 16
          %s187 = scalar_lea.vmem [#allocation6], %s186
          %s188 = sadd.s32 %s25, %s26
          %190 = vsyncadd %s184, 0
          %s191 = smul.addr %s188, 2
          %s192 = smul.addr %s191, 8
          %s193 = scalar_lea.hbm %s1, %s192
          %s195 = sshll.u32 %s193, 4
          %s196 = int_to_ptr.hbm [resolvable:$true] %s195
          %s197 = sshll.u32 %s187, 4
          %s198 = int_to_ptr.vmem [resolvable:$true] %s197
          %200 = dma.hbm_to_vmem [thread:$0]  %s196, 256, %s198, %s184
        $region24: #{tpu_custom_call.1} parent=15 // pred_fallthru
          _
        // Predicated region
        $region25: #{tpu_custom_call.1} parent=15 // pred_check
          %p201 = pneg %p108
        $region26: #{tpu_custom_call.1} parent=15 // pred_check_branch
          %203 = sbr.rel (%p201) target = $region28
        $region27: #{tpu_custom_call.1} parent=15 // pred_region
          %s204 = sadd.s32 %s25, %s26
          %p205 = scmp.lt.s32.totalorder %s204, 1
          %s206 = scalar_select %p205, %s204, 1
          %s207 = smul.addr %s206, 8
          %s208 = scalar_lea.vmem %s2, %s207
          %s209 = sadd.s32 %s25, %s26
        $region28: #{tpu_custom_call.1} parent=15 // pred_fallthru
          _
      $region16: #{tpu_custom_call.1} parent=5 // pred_fallthru
        _
      %p210 = scmp.le.s32.totalorder 1, %s18
      %p211 = scmp.lt.s32.totalorder %s18, 3
      %p212 = pnand %p210, %p211
      %p213 = pneg %p212
      // Predicated region
      $region29: #{tpu_custom_call.1} parent=5 // pred_check
        _
      $region30: #{tpu_custom_call.1} parent=5 // pred_check_branch
        %215 = sbr.rel (%p212) target = $region32
      $region31: #{tpu_custom_call.1} parent=5 // pred_region
        %s216 = ssub.s32 %s18, 1
        %s217 = sand.u32 %s45, 1
        %s218 = scalar_lea.sflag [#allocation4], %s217
        %s219 = sand.u32 %s45, 1
        %s220 = smul.addr %s219, 16
        %s221 = scalar_lea.vmem [#allocation3], %s220
        // Predicated region
        $region33: #{tpu_custom_call.1} parent=31 // pred_check
          %p222 = pneg %p58
        $region34: #{tpu_custom_call.1} parent=31 // pred_check_branch
          %224 = sbr.rel (%p222) target = $region36
        $region35: #{tpu_custom_call.1} parent=31 // pred_region
          %226 = dma.done %s218, 256
        $region36: #{tpu_custom_call.1} parent=31 // pred_fallthru
          _
        %s227 = sand.u32 %s73, 1
        %s228 = scalar_lea.sflag [#allocation7], %s227
        %s229 = sand.u32 %s73, 1
        %s230 = smul.addr %s229, 16
        %s231 = scalar_lea.vmem [#allocation6], %s230
        // Predicated region
        $region37: #{tpu_custom_call.1} parent=31 // pred_check
          %p232 = pneg %p86
        $region38: #{tpu_custom_call.1} parent=31 // pred_check_branch
          %234 = sbr.rel (%p232) target = $region40
        $region39: #{tpu_custom_call.1} parent=31 // pred_region
          %236 = dma.done %s228, 256
        $region40: #{tpu_custom_call.1} parent=31 // pred_fallthru
          _
        %s237 = sand.u32 %s45, 1
        %s238 = scalar_lea.sflag [#allocation4], %s237
        %s239 = sand.u32 %s45, 1
        %s240 = smul.addr %s239, 16
        %s241 = scalar_lea.vmem [#allocation3], %s240
        %p242 = pneg %p58
        %p243 = pneg %p55
        %s244 = sand.u32 %s73, 1
        %s245 = scalar_lea.sflag [#allocation7], %s244
        %s246 = sand.u32 %s73, 1
        %s247 = smul.addr %s246, 16
        %s248 = scalar_lea.vmem [#allocation6], %s247
        %p249 = pneg %p86
        %p250 = pneg %p83
        %s251 = sadd.s32 %s27, %s28
        %p252 = scmp.lt.s32.totalorder %s251, 1
        %s253 = scalar_select %p252, %s251, 1
        %s254 = smul.addr %s253, 8
        %s255 = scalar_lea.vmem %s2, %s254
        %p256 = pneg %p114
        %p257 = pneg %p111
        %p258 = pneg %p140
        %p259 = pneg %p137
        %s260 = sand.u32 %s127, 1
        %s261 = scalar_lea.sflag [#allocation5], %s260
        %s262 = sand.u32 %s127, 1
        %s263 = scalar_lea.vmem [#allocation8], %s262
        %s264 = sadd.s32 %s27, %s28
        %s265 = sadd.s32 %s27, %s28
        %s266 = sadd.s32 %s27, %s28
        %p267 = scmp.lt.s32.totalorder %s266, 1
        %s268 = scalar_select %p267, %s266, 1
        %s269 = smul.addr %s268, 8
        %s270 = scalar_lea.vmem %s2, %s269
        %s271 = sadd.s32 %s27, %s28
        %p272 = scmp.eq.s32.totalorder %s28, 0
        // Predicated region
        $region41: #{tpu_custom_call.1} parent=31 // pred_check
          %p273 = pneg %p272
        $region42: #{tpu_custom_call.1} parent=31 // pred_check_branch
          %275 = sbr.rel (%p273) target = $region44
        $region43: #{tpu_custom_call.1} parent=31 // pred_region
          %v276 = vlaneseq
          %vm277 = vcmp.ge.s32.totalorder %v276, 0
          %vm278 = vcmp.lt.s32.totalorder %v276, 256
          %vm279 = vmand %vm277, %vm278
          %280 = vst.msk [vmem:[#allocation2] sm:$0x3] %vm279, 0.0
        $region44: #{tpu_custom_call.1} parent=31 // pred_fallthru
          _
        %v281 = vld [vmem:[%s221] sm:$0xff]
        %v282 = vld [vmem:[%s221 + $0x8] sm:$0xff]
        %v283 = vld [vmem:[%s231] sm:$0xff]
        %v284 = vld [vmem:[%s231 + $0x8] sm:$0xff]
        %v285 = vsub.f32 %v281, %v283
        %v286 = vsub.f32 %v282, %v284
        %v287 = vmul.f32 %v285, %v285
        %v288 = vmul.f32 %v286, %v286
        %v289 = vld [vmem:[%s270] sm:$0xff]
        %291 = vset.pattern.permute.xlu0 0
        %292 = vperm.xlu0 %291, %v289
        %v293 = vpop.permute.xlu0 %292
        %v295 = vmul.f32 %v287, %v293
        %v296 = vmul.f32 %v288, %v293
        %v297 = vld [vmem:[#allocation2] sm:$0x3]
        %v298 = vrot.slane %v295, 4
        %v299 = vadd.f32 %v295, %v298
        %v300 = vrot.slane %v299, 2
        %v301 = vadd.f32 %v299, %v300
        %v302 = vrot.slane %v301, 1
        %v303 = vadd.f32 %v301, %v302
        %v304 = vrot.slane %v296, 4
        %v305 = vadd.f32 %v296, %v304
        %v306 = vrot.slane %v305, 2
        %v307 = vadd.f32 %v305, %v306
        %v308 = vrot.slane %v307, 1
        %v309 = vadd.f32 %v307, %v308
        %v312 = vrot.slane %v309, 7
        %vm313 = vcmask 1040384
        %v314 = vsel %vm313, %v303, %v312
        %v316 = vadd.f32 %v297, %v314
        %v317 = vlaneseq
        %vm318 = vcmp.ge.s32.totalorder %v317, 0
        %vm319 = vcmp.lt.s32.totalorder %v317, 256
        %vm320 = vmand %vm318, %vm319
        %321 = vst.msk [vmem:[#allocation2] sm:$0x3] %vm320, %v316
        // Predicated region
        $region45: #{tpu_custom_call.1} parent=31 // pred_check
          %p322 = pneg %p272
        $region46: #{tpu_custom_call.1} parent=31 // pred_check_branch
          %324 = sbr.rel (%p322) target = $region48
        $region47: #{tpu_custom_call.1} parent=31 // pred_region
          %v325 = vlaneseq
          %v326 = vand.u32 %v325, 127
          %vm327 = vcmp.eq.s32.totalorder %v326, 0
          %v328 = vld [vmem:[#allocation2] sm:$0x3]
          %v330 = vperm.slane %v328, 0
          %v331 = vperm.slane %v328, 1
          %v334 = vsel %vm313, %v330, 0.0
          %v335 = vsel %vm313, %v331, 0.0
          %v336 = vadd.f32 %v334, %v335
          %337 = vadd.xlane.f32.xlu0 %v336
          %v338 = vpop.xlane.xlu0 %337
          %v339 = vrot.slane %v338, 4
          %v340 = vadd.f32 %v338, %v339
          %v341 = vrot.slane %v340, 2
          %v342 = vadd.f32 %v340, %v341
          %v343 = vrot.slane %v342, 1
          %v344 = vadd.f32 %v342, %v343
          %s345 = vtos %v344
          %v346 = vstv %s345
          %v347 = vsel %vm327, %v346, 0.0
          %348 = vst [vmem:[%s263] sm:$0x1] %v347
        $region48: #{tpu_custom_call.1} parent=31 // pred_fallthru
          _
        %s349 = sand.u32 %s127, 1
        %s350 = scalar_lea.sflag [#allocation5], %s349
        %s351 = sand.u32 %s127, 1
        %s352 = scalar_lea.vmem [#allocation8], %s351
        // Predicated region
        $region49: #{tpu_custom_call.1} parent=31 // pred_check
          %p353 = pneg %p137
        $region50: #{tpu_custom_call.1} parent=31 // pred_check_branch
          %355 = sbr.rel (%p353) target = $region52
        $region51: #{tpu_custom_call.1} parent=31 // pred_region
          %357 = vsyncadd %s350, 0
          %s358 = scalar_lea.hbm %s3, %s27
          %s360 = sshll.u32 %s352, 4
          %s361 = int_to_ptr.vmem [resolvable:$true] %s360
          %s362 = sshll.u32 %s358, 4
          %s363 = int_to_ptr.hbm [resolvable:$true] %s362
          %365 = dma.vmem_to_hbm [thread:$0]  %s361, 16, %s363, %s350
        $region52: #{tpu_custom_call.1} parent=31 // pred_fallthru
          _
      $region32: #{tpu_custom_call.1} parent=5 // pred_fallthru
        _
      %p366 = scmp.le.s32.totalorder 2, %s18
      // Predicated region
      $region53: #{tpu_custom_call.1} parent=5 // pred_check
        %p367 = pneg %p366
      $region54: #{tpu_custom_call.1} parent=5 // pred_check_branch
        %369 = sbr.rel (%p367) target = $region56
      $region55: #{tpu_custom_call.1} parent=5 // pred_region
        %s370 = ssub.s32 %s18, 2
        // Predicated region
        $region57: #{tpu_custom_call.1} parent=55 // pred_check
          %p371 = pneg %p143
        $region58: #{tpu_custom_call.1} parent=55 // pred_check_branch
          %373 = sbr.rel (%p371) target = $region60
        $region59: #{tpu_custom_call.1} parent=55 // pred_region
          %s374 = sand.u32 %s128, 1
          %s375 = scalar_lea.sflag [#allocation5], %s374
          %s376 = sand.u32 %s128, 1
          %s377 = scalar_lea.vmem [#allocation8], %s376
          %379 = dma.done %s375, 16
        $region60: #{tpu_custom_call.1} parent=55 // pred_fallthru
          _
      $region56: #{tpu_custom_call.1} parent=5 // pred_fallthru
        _
    $region6: #{tpu_custom_call.1} parent=1 // loop_footer
      %s22 = sadd.s32 1, %s18
    $region7: #{tpu_custom_call.1} parent=1 // loop_footer_branch
      %17 = sbr.rel target = $region3
    $region8: #{tpu_custom_call.1} parent=1 // loop_exit
      _
    %380 = vsyncpa [#allocation4], 1
    %s381 = scalar_lea.sflag [#allocation4], 1
    %382 = vsyncpa %s381, 1
    %383 = vsyncpa [#allocation7], 1
    %s384 = scalar_lea.sflag [#allocation7], 1
    %385 = vsyncpa %s384, 1
    %386 = vsyncpa [#allocation5], 1
    %s387 = scalar_lea.sflag [#allocation5], 1
    %388 = vsyncpa %s387, 1

</llo_original>
